<compile_context>
chip_gen: v5e
topology: v5e:2x2
jax: 0.10.0
libtpu: 0.0.40
codegen_flags: <defaults>
</compile_context>

<pallas_src>
import functools

import jax
import jax.numpy as jnp
from jax import lax
from jax.experimental import pallas as pl
from jax.experimental.pallas import tpu as pltpu

_EPS = 1e-12                              # F.normalize default eps

_TARGET_BLOCK_BYTES = 2 * 1024 * 1024     # aim for >= ~2 MiB per input block
_VMEM_BUDGET = 12 * 1024 * 1024           # conservative double-buffer budget (v5e default scoped VMEM = 16 MiB)
_VMEM_LIMIT = 32 * 1024 * 1024            # explicit scoped-VMEM limit; safe on v5e/v6e (128 MiB) and v7x (64 MiB)
_MAX_TILE_E = 16 * 1024                   # edges per tile (multiple of 128)
_MAX_TILE_N = 16 * 1024                   # rows per tile  (multiple of 16)

# Fused-gather path limits.  The in-kernel gather is an MXU one-hot matmul, so the node
# tables must be VMEM-resident and small enough that building the [N, tile_e] one-hot
# (O(N) VALU ops per edge) stays cheaper than the 2*E*D*4-byte HBM round trip it removes.
_MAX_FUSED_ROWS = 512
_MAX_FUSED_TABLE_BYTES = 2 * 1024 * 1024  # combined src+dst normalized-table bytes


def _round_up(x, m):
    return (x + m - 1) // m * m


# ------------------------------ kernels -------------------------------------

def _l2_normalize_kernel(x_ref, o_ref):
    """Row-wise L2 normalization of a [tile_n, D] tile (F.normalize semantics)."""
    x = x_ref[...].astype(jnp.float32)
    sumsq = jnp.sum(x * x, axis=-1, keepdims=True)
    # x / max(||x||, eps) == x * rsqrt(max(sum(x^2), eps^2)): one EUP rsqrt, no VALU work.
    o_ref[...] = (x * lax.rsqrt(jnp.maximum(sumsq, _EPS * _EPS))).astype(o_ref.dtype)


def _edge_dot_rows_kernel(u_ref, v_ref, o_ref):
    """Per-row dot of two [tile_e, D] tiles of pre-normalized, pre-gathered rows -> [tile_e, 1]."""
    u = u_ref[...].astype(jnp.float32)
    v = v_ref[...].astype(jnp.float32)
    o_ref[...] = jnp.sum(u * v, axis=1, keepdims=True).astype(o_ref.dtype)


def _fused_edge_kernel(src_tab_ref, dst_tab_ref, src_ids_ref, dst_ids_ref, o_ref):
    """Fused gather + per-edge dot.

    src_tab_ref / dst_tab_ref: [N_pad, D] normalized node tables, VMEM-resident across the
        whole edge grid (constant block index -> DMA'd from HBM only once).
    src_ids_ref / dst_ids_ref: [1, tile_e] int32 endpoint ids of the current edge tile.
    The gather is an MXU one-hot matmul so the [E, D] per-edge feature copies never touch
    HBM.  (For bit-exact f32 gathered values, pass precision=HIGHEST to the dots.)
    """
    n_u = src_tab_ref.shape[0]
    n_v = dst_tab_ref.shape[0]
    te = o_ref.shape[1]
    src_ids = src_ids_ref[...]                                    # [1, te] int32
    dst_ids = dst_ids_ref[...]
    oh_u = jnp.where(lax.broadcasted_iota(jnp.int32, (n_u, te), 0) == src_ids, 1.0, 0.0)
    oh_v = jnp.where(lax.broadcasted_iota(jnp.int32, (n_v, te), 0) == dst_ids, 1.0, 0.0)
    tab_u = src_tab_ref[...].astype(jnp.float32)                  # [n_u, d]
    tab_v = dst_tab_ref[...].astype(jnp.float32)
    u = jnp.dot(tab_u.T, oh_u, preferred_element_type=jnp.float32)   # [d, te] == table[src_ids].T
    v = jnp.dot(tab_v.T, oh_v, preferred_element_type=jnp.float32)   # [d, te] == table[dst_ids].T
    # Edges live on the lane axis -> the [1, tile_e] store below is lane-dense.
    o_ref[...] = jnp.sum(u * v, axis=0, keepdims=True).astype(o_ref.dtype)


# ------------------------------ tile sizing ---------------------------------

def _pick_tile_n(n, d):
    """Row tile for the normalize kernel: biggest multiple of 16 targeting ~2 MiB blocks."""
    cap = _VMEM_BUDGET // (4 * d * 4)                # in + out, double-buffered, f32 sizing
    tn = min(_TARGET_BLOCK_BYTES // (d * 4), cap, _MAX_TILE_N)
    tn = max(16, tn // 16 * 16)
    return min(tn, _round_up(n, 16))


def _pick_tile_e_rows(e, d, itemsize):
    """Edge tile for the row-gathered dot kernel: ~2 MiB blocks, >=2 grid steps if possible."""
    cap = _VMEM_BUDGET // (2 * 2 * d * itemsize)     # 2 gathered inputs, double-buffered
    te = min(_TARGET_BLOCK_BYTES // (d * itemsize), cap, _MAX_TILE_E)
    te = max(128, te // 128 * 128)
    e_pad = _round_up(e, 128)
    if e_pad <= te:
        # Keep >= 2 grid steps so both v7x TensorCores get work on the "parallel" axis.
        te = max(128, (e_pad // 2) // 128 * 128)
    return te


def _pick_tile_e_fused(e, n_max):
    """Edge tile for the fused kernel: keep each [N, tile_e] one-hot at <= ~1 MiB of f32."""
    te = min(4096, max(128, ((1 << 20) // (4 * max(n_max, 1))) // 128 * 128))
    e_pad = _round_up(e, 128)
    if e_pad <= te:
        te = max(128, (e_pad // 2) // 128 * 128)
    return te


# ------------------------------ wrappers ------------------------------------

@functools.partial(jax.jit, static_argnames=("tile_n", "out_dtype"))
def _l2_normalize(h, tile_n, out_dtype):
    """[N, D] -> [N, D] L2-normalized along the feature dim (done ONCE per node type)."""
    n, d = h.shape
    n_pad = _round_up(n, tile_n)
    hp = jnp.pad(h, ((0, n_pad - n), (0, 0)))
    out = pl.pallas_call(
        _l2_normalize_kernel,
        out_shape=jax.ShapeDtypeStruct((n_pad, d), out_dtype),
        grid_spec=pltpu.PrefetchScalarGridSpec(
            num_scalar_prefetch=0,
            grid=(n_pad // tile_n,),
            in_specs=[pl.BlockSpec((tile_n, d), lambda i: (i, 0))],
            out_specs=pl.BlockSpec((tile_n, d), lambda i: (i, 0)),
        ),
        compiler_params=pltpu.CompilerParams(
            dimension_semantics=("parallel",),
            vmem_limit_bytes=_VMEM_LIMIT),
        cost_estimate=pl.CostEstimate(
            flops=3 * n_pad * d,
            transcendentals=n_pad,
            bytes_accessed=int(n_pad * d * (h.dtype.itemsize + jnp.dtype(out_dtype).itemsize))),
    )(hp)
    return out[:n]


@functools.partial(jax.jit, static_argnames=("tile_e",))
def _edge_cosine_fused(norm_src, norm_dst, src_ids, dst_ids, tile_e):
    """Small-table path: node tables VMEM-resident, endpoint gather fused into the kernel."""
    n_src, d = norm_src.shape
    n_dst = norm_dst.shape[0]
    e = src_ids.shape[0]
    e_pad = _round_up(e, tile_e)
    # Pad tables to a sublane multiple; padded rows are never selected (ids < N).
    ns_pad = _round_up(n_src, 8)
    nd_pad = _round_up(n_dst, 8)
    tab_src = jnp.pad(norm_src, ((0, ns_pad - n_src), (0, 0)))
    tab_dst = jnp.pad(norm_dst, ((0, nd_pad - n_dst), (0, 0)))
    src_p = jnp.pad(src_ids.astype(jnp.int32), (0, e_pad - e)).reshape(1, e_pad)
    dst_p = jnp.pad(dst_ids.astype(jnp.int32), (0, e_pad - e)).reshape(1, e_pad)

    cos = pl.pallas_call(
        _fused_edge_kernel,
        out_shape=jax.ShapeDtypeStruct((1, e_pad), jnp.float32),
        grid_spec=pltpu.PrefetchScalarGridSpec(
            num_scalar_prefetch=0,
            grid=(e_pad // tile_e,),
            in_specs=[
                # Constant block index -> normalized tables are DMA'd into VMEM once and
                # stay resident across every edge tile (no per-edge [E, D] HBM traffic).
                pl.BlockSpec((ns_pad, d), lambda i: (0, 0)),
                pl.BlockSpec((nd_pad, d), lambda i: (0, 0)),
                pl.BlockSpec((1, tile_e), lambda i: (0, i)),
                pl.BlockSpec((1, tile_e), lambda i: (0, i)),
            ],
            out_specs=pl.BlockSpec((1, tile_e), lambda i: (0, i)),
        ),
        compiler_params=pltpu.CompilerParams(
            dimension_semantics=("parallel",),
            vmem_limit_bytes=_VMEM_LIMIT),
        cost_estimate=pl.CostEstimate(
            flops=int(2 * e_pad * d * (ns_pad + nd_pad) + 2 * e_pad * (ns_pad + nd_pad)),
            transcendentals=0,
            bytes_accessed=int((ns_pad + nd_pad) * d * norm_src.dtype.itemsize + 3 * e_pad * 4)),
    )(tab_src, tab_dst, src_p, dst_p)
    return cos[0, :e].reshape(e, 1)


@functools.partial(jax.jit, static_argnames=("tile_e",))
def _edge_cosine_gathered(norm_src, norm_dst, src_ids, dst_ids, tile_e):
    """Large-table path: XLA ROW gather (axis=0, untransposed table) + tiled dot kernel."""
    d = norm_src.shape[1]
    e = src_ids.shape[0]
    e_pad = _round_up(e, tile_e)
    src_p = jnp.pad(src_ids, (0, e_pad - e))
    dst_p = jnp.pad(dst_ids, (0, e_pad - e))

    # Row gather of already-normalized features: cheap dynamic-slice stream, no .T and no
    # minor-axis (cross-lane) gather as in the previous version.
    u = jnp.take(norm_src, src_p, axis=0)            # [E_pad, D]
    v = jnp.take(norm_dst, dst_p, axis=0)            # [E_pad, D]

    cos = pl.pallas_call(
        _edge_dot_rows_kernel,
        out_shape=jax.ShapeDtypeStruct((e_pad, 1), jnp.float32),
        grid_spec=pltpu.PrefetchScalarGridSpec(
            num_scalar_prefetch=0,
            grid=(e_pad // tile_e,),
            in_specs=[pl.BlockSpec((tile_e, d), lambda i: (i, 0)),
                      pl.BlockSpec((tile_e, d), lambda i: (i, 0))],
            out_specs=pl.BlockSpec((tile_e, 1), lambda i: (i, 0)),
        ),
        compiler_params=pltpu.CompilerParams(
            dimension_semantics=("parallel",),
            vmem_limit_bytes=_VMEM_LIMIT),
        cost_estimate=pl.CostEstimate(
            flops=2 * e_pad * d,
            transcendentals=0,
            bytes_accessed=int(2 * e_pad * d * norm_src.dtype.itemsize + e_pad * 4)),
    )(u, v)
    return cos[:e]


def cosine_prediction(node_feats, edges_by_etype, *, storage_dtype=jnp.float32,
                      force_unfused=False):
    """
    node_feats: dict ntype -> [N_ntype, D] features ('h' in the DGL graph).
    edges_by_etype: dict (src_ntype, etype, dst_ntype) -> (src_ids [E], dst_ids [E]).
    storage_dtype: dtype of the normalized node tables (bf16 halves hot-path HBM bytes;
        cosines then move by ~1e-3).  Compute stays f32 inside the kernels.
    Returns dict canonical_etype -> [E, 1] cosine ratings (graph.edata['cos']).
    """
    # Normalize each node type ONCE (== F.normalize(graph.nodes[nt].data['h'])),
    # stored untransposed [N, D] so endpoint gathers are row gathers.
    norm = {}
    for nt, h in node_feats.items():
        n, d = h.shape
        norm[nt] = _l2_normalize(h, tile_n=_pick_tile_n(n, d), out_dtype=storage_dtype)

    itemsize = jnp.dtype(storage_dtype).itemsize
    ratings = {}
    for cet, (src_ids, dst_ids) in edges_by_etype.items():
        src_nt, _, dst_nt = cet
        e = int(src_ids.shape[0])
        if e == 0:
            ratings[cet] = jnp.zeros((0, 1), jnp.float32)
            continue
        n_src, d = norm[src_nt].shape
        n_dst = norm[dst_nt].shape[0]
        table_bytes = (n_src + n_dst) * d * itemsize
        use_fused = (not force_unfused
                     and n_src <= _MAX_FUSED_ROWS and n_dst <= _MAX_FUSED_ROWS
                     and table_bytes <= _MAX_FUSED_TABLE_BYTES)
        if use_fused:
            tile_e = _pick_tile_e_fused(e, max(n_src, n_dst))
            ratings[cet] = _edge_cosine_fused(norm[src_nt], norm[dst_nt],
                                              src_ids, dst_ids, tile_e=tile_e)
        else:
            # TODO(synk): a fully fused large-table variant needs either a Mosaic vector
            # gather (no general lowering for arbitrary-N in-kernel jnp.take) or a DMA row
            # gather from an HBM-resident table, which is descriptor-bound at small D.
            tile_e = _pick_tile_e_rows(e, d, itemsize)
            ratings[cet] = _edge_cosine_gathered(norm[src_nt], norm[dst_nt],
                                                 src_ids, dst_ids, tile_e=tile_e)
    return ratings


if __name__ == "__main__":
    key = jax.random.PRNGKey(0)
    k_u, k_i, k_es, k_ed = jax.random.split(key, 4)

    num_users, num_items, hidden = 6, 5, 32
    num_edges = 16

    node_feats = {
        "user": jax.random.normal(k_u, (num_users, hidden), dtype=jnp.float32),
        "item": jax.random.normal(k_i, (num_items, hidden), dtype=jnp.float32),
    }
    src_ids = jax.random.randint(k_es, (num_edges,), 0, num_users)
    dst_ids = jax.random.randint(k_ed, (num_edges,), 0, num_items)
    edges_by_etype = {
        ("user", "clicks", "item"): (src_ids, dst_ids),
        ("item", "clicked-by", "user"): (dst_ids, src_ids),
    }

    # Reference in plain JAX (mirrors F.normalize + u_dot_v).
    def ref(u, v):
        un = u / jnp.maximum(jnp.linalg.norm(u, axis=-1, keepdims=True), _EPS)
        vn = v / jnp.maximum(jnp.linalg.norm(v, axis=-1, keepdims=True), _EPS)
        return jnp.sum(un * vn, axis=-1, keepdims=True)

    def check(out, atol):
        for cet, (s_ids, d_ids) in edges_by_etype.items():
            s_nt, _, d_nt = cet
            expect = ref(jnp.take(node_feats[s_nt], s_ids, axis=0),
                         jnp.take(node_feats[d_nt], d_ids, axis=0))
            assert out[cet].shape == (num_edges, 1), cet
            assert jnp.allclose(out[cet], expect, atol=atol), cet

    # 1) Default path: fused in-kernel gather (tables are small -> VMEM-resident).
    #    The one-hot gather runs on the MXU at its native mixed precision, so allow a
    #    bf16-level tolerance here; the row-gather path below is checked tightly in f32.
    out_fused = jax.block_until_ready(cosine_prediction(node_feats, edges_by_etype))
    check(out_fused, atol=3e-3)

    # 2) Large-table fallback (forced here): XLA row gather + tiled dot kernel, pure f32.
    out_rows = jax.block_until_ready(
        cosine_prediction(node_feats, edges_by_etype, force_unfused=True))
    check(out_rows, atol=1e-5)

    # 3) bf16 storage of the normalized tables (halves hot-path HBM bytes).
    out_bf16 = jax.block_until_ready(
        cosine_prediction(node_feats, edges_by_etype, storage_dtype=jnp.bfloat16))
    check(out_bf16, atol=1e-2)

    print("KERNEL_OK")
</pallas_src>

<mosaic_0001>
module attributes {stable_mosaic.version = 11 : i64} {
  func.func @_l2_normalize_kernel(%arg0: i32, %arg1: memref<16x32xf32, #tpu.memory_space<vmem>>, %arg2: memref<16x32xf32, #tpu.memory_space<vmem>>) attributes {dimension_semantics = [#tpu.dimension_semantics<parallel>], iteration_bounds = array<i64: 1>, scalar_prefetch = 0 : i64, scratch_operands = 0 : i64, tpu.core_type = #tpu.core_type<tc>, window_params = [{transform_indices = @transform_0, window_bounds = array<i64: 16, 32>}, {transform_indices = @transform_1, window_bounds = array<i64: 16, 32>}]} {
    %c0 = arith.constant 0 : index
    %c0_0 = arith.constant 0 : index
    %0 = vector.load %arg1[%c0, %c0_0] : memref<16x32xf32, #tpu.memory_space<vmem>>, vector<16x32xf32>
    %1 = arith.mulf %0, %0 : vector<16x32xf32>
    %cst = arith.constant dense<0.000000e+00> : vector<16xf32>
    %2 = vector.multi_reduction <add>, %1, %cst [1] : vector<16x32xf32> to vector<16xf32>
    %3 = vector.shape_cast %2 : vector<16xf32> to vector<16x1xf32>
    %cst_1 = arith.constant 1.000000e-24 : f32
    %4 = vector.broadcast %cst_1 : f32 to vector<16x1xf32>
    %5 = arith.maximumf %3, %4 : vector<16x1xf32>
    %6 = math.rsqrt %5 : vector<16x1xf32>
    %7 = vector.broadcast %6 : vector<16x1xf32> to vector<16x32xf32>
    %8 = arith.mulf %0, %7 : vector<16x32xf32>
    %c0_2 = arith.constant 0 : index
    %c0_3 = arith.constant 0 : index
    %9 = vector.load %arg2[%c0_2, %c0_3] : memref<16x32xf32, #tpu.memory_space<vmem>>, vector<16x32xf32>
    tpu.vector_store %arg2[%c0_2, %c0_3], %8 {strides = array<i32>} : memref<16x32xf32, #tpu.memory_space<vmem>>, vector<16x32xf32>,
    return
  }
  func.func @transform_0(%arg0: i32) -> (i32, i32) {
    %c0_i32 = arith.constant 0 : i32
    %c0_i32_0 = arith.constant 0 : i32
    return %arg0, %c0_i32 : i32, i32
  }
  func.func @transform_1(%arg0: i32) -> (i32, i32) {
    %c0_i32 = arith.constant 0 : i32
    %c0_i32_0 = arith.constant 0 : i32
    return %arg0, %c0_i32 : i32, i32
  }
}

</mosaic_0001>

<llo_original>
// kernel: _l2_normalize.1
$region0: #{_l2_normalize.1}
  #allocation0 [shape = 'u32[]', space=smem, size = 0x4, offset = 0x4, fixed_abs, tag = 'smem constant byte address 0x4 - core index']
  #allocation1 [shape = 'u32[72,128]{1,0:T(1,128)}', space=vmem, size = 0x9000, scoped, tag = 'internal scratch']
  %s0 = inlined_call_operand.vmem [shape: f32[16,32], index: 0, kind: input, shape index: {}]
  %s1 = inlined_call_operand.vmem [shape: f32[16,32], index: 1, kind: output, shape index: {}]
  %s2 = sld [smem:[#allocation0]]
  $region14: #{_l2_normalize.1} parent=0
    _
  %s4 = ssub.s32 1, %s2
  %s5 = scalar_select 0, %s4, %s2
  // Predicated region
  $region2: #{_l2_normalize.1} parent=0 // pred_check
    _
  $region3: #{_l2_normalize.1} parent=0 // pred_check_branch
    %7 = sbr.rel (0) target = $region5
  $region4: #{_l2_normalize.1} parent=0 // pred_region
    _
  $region5: #{_l2_normalize.1} parent=0 // pred_fallthru
    _
  %v8 = vld [vmem:[%s0] sm:$0xff]
  %v9 = vld [vmem:[%s0 + $0x8] sm:$0xff]
  %v10 = vmul.f32 %v8, %v8
  %v11 = vmul.f32 %v9, %v9
  %vm12 = vcmask 261120
  %v13 = vsel %vm12, %v10, 0.0
  %14 = vadd.xlane.f32.xlu0 %v13
  %v15 = vpop.xlane.xlu0 %14
  %v16 = vsel %vm12, %v11, 0.0
  %17 = vadd.xlane.f32.xlu0 %v16
  %v18 = vpop.xlane.xlu0 %17
  %v19 = vmax.f32 %v15, 1e-24
  %v20 = vmax.f32 %v18, 1e-24
  %v21 = vrsqrt.pop %v19
  %v22 = vmul.f32 %v21, %v19
  %v23 = vmul.f32 %v22, %v21
  %v24 = vmul.f32 0.5, %v23
  %v25 = vsub.f32 1.5, %v24
  %v26 = vmul.f32 %v21, %v25
  %vm27 = vweird.f32 %v19
  %vm28 = vweird.f32 %v21
  %vm29 = vmor %vm27, %vm28
  %v30 = vsel %vm29, %v21, %v26
  %v31 = vrsqrt.pop %v20
  %v32 = vmul.f32 %v31, %v20
  %v33 = vmul.f32 %v32, %v31
  %v34 = vmul.f32 0.5, %v33
  %v35 = vsub.f32 1.5, %v34
  %v36 = vmul.f32 %v31, %v35
  %vm37 = vweird.f32 %v20
  %vm38 = vweird.f32 %v31
  %vm39 = vmor %vm37, %vm38
  %v40 = vsel %vm39, %v31, %v36
  %v41 = vmul.f32 %v8, %v30
  %v42 = vmul.f32 %v9, %v40
  %43 = vst.msk [vmem:[%s1] sm:$0xff] %vm12, %v41
  %44 = vst.msk [vmem:[%s1 + $0x8] sm:$0xff] %vm12, %v42
  // Predicated region
  $region6: #{_l2_normalize.1} parent=0 // pred_check
    _
  $region7: #{_l2_normalize.1} parent=0 // pred_check_branch
    %46 = sbr.rel (0) target = $region9
  $region8: #{_l2_normalize.1} parent=0 // pred_region
    _
  $region9: #{_l2_normalize.1} parent=0 // pred_fallthru
    _
  // Predicated region
  $region10: #{_l2_normalize.1} parent=0 // pred_check
    _
  $region11: #{_l2_normalize.1} parent=0 // pred_check_branch
    %48 = sbr.rel (0) target = $region13
  $region12: #{_l2_normalize.1} parent=0 // pred_region
    _
  $region13: #{_l2_normalize.1} parent=0 // pred_fallthru
    _

</llo_original>
